<compile_context>
chip_gen: v6e
topology: v6e:2x2x1
jax: 0.10.0
libtpu: 0.0.40
codegen_flags: <defaults>
</compile_context>

<pallas_src>
import jax
import jax.numpy as jnp
from jax.experimental import pallas as pl
from jax.experimental.pallas import tpu as pltpu

BN_EPS = 1e-5


def _vmem_spec():
    return pl.BlockSpec(memory_space=pltpu.MemorySpace.VMEM)


# ----------------------------- fused cell kernel --------------------------------


def _make_cell_kernel(n_nodes, out_shape):
    C = out_shape

    def cell_kernel(*refs):
        # refs layout:
        #   s0, s1, pre0_w, pre0_b, pre1_w, pre1_b,
        #   [node0_wblkdiag, node0_bcat, node1_wblkdiag, node1_bcat, ...],
        #   o_ref
        s0_ref, s1_ref, pw0_ref, pb0_ref, pw1_ref, pb1_ref = refs[:6]
        node_refs = refs[6:6 + 2 * n_nodes]
        o_ref = refs[6 + 2 * n_nodes]

        # preprocess: Swish(Linear) with BN already folded into (w, b)
        t0 = jnp.dot(s0_ref[...], pw0_ref[...],
                     preferred_element_type=jnp.float32) + pb0_ref[...]
        t0 = t0 * jax.nn.sigmoid(t0)
        t1 = jnp.dot(s1_ref[...], pw1_ref[...],
                     preferred_element_type=jnp.float32) + pb1_ref[...]
        t1 = t1 * jax.nn.sigmoid(t1)

        tensors = [t0, t1]
        for node_idx in range(n_nodes):
            w_ref = node_refs[2 * node_idx]       # (2C, 2C) block-diagonal
            b_ref = node_refs[2 * node_idx + 1]   # (1, 2C)
            # InputChoice: deterministically the last two previous nodes.
            i0, i1 = node_idx, node_idx + 1
            x_cat = jnp.concatenate([tensors[i0], tensors[i1]], axis=1)  # (B, 2C)
            y = jnp.dot(x_cat, w_ref[...],
                        preferred_element_type=jnp.float32) + b_ref[...]
            y = y * jax.nn.sigmoid(y)                                     # Swish
            cur = y[:, :C] + y[:, C:]                                     # sum of the 2 chosen ops
            tensors.append(cur)
            # lane-dense write straight into the concatenated output slab
            o_ref[:, pl.ds(node_idx * C, C)] = cur

    return cell_kernel


def cell_forward(params, s0, s1, n_nodes, out_shape):
    B = s0.shape[0]
    C = out_shape
    inputs = [s0, s1,
              params["pre0_wf"], params["pre0_bf"],
              params["pre1_wf"], params["pre1_bf"]]
    for node_idx in range(n_nodes):
        w_bd, b_cat = params["node_fused"][node_idx]
        inputs.append(w_bd)
        inputs.append(b_cat)

    flops = 2 * B * (s0.shape[1] * C + s1.shape[1] * C + n_nodes * (2 * C) * (2 * C))
    transcendentals = B * (2 * C + n_nodes * 2 * C)            # one sigmoid per element
    bytes_accessed = sum(int(x.size) * 4 for x in inputs) + B * n_nodes * C * 4

    return pl.pallas_call(
        _make_cell_kernel(n_nodes, C),
        out_shape=jax.ShapeDtypeStruct((B, n_nodes * C), jnp.float32),
        in_specs=[_vmem_spec()] * len(inputs),
        out_specs=_vmem_spec(),
        cost_estimate=pl.CostEstimate(flops=flops,
                                      transcendentals=transcendentals,
                                      bytes_accessed=bytes_accessed),
    )(*inputs)


# ----------------------------- parameter setup (glue, plain JAX) ----------------


def _linear_init(key, fan_in, fan_out):
    # Mimic PyTorch nn.Linear default: U(-1/sqrt(fan_in), 1/sqrt(fan_in)),
    # weight stored pre-transposed as (in, out) so the kernel does x @ W.
    kw, kb = jax.random.split(key)
    bound = 1.0 / jnp.sqrt(jnp.float32(fan_in))
    w = jax.random.uniform(kw, (fan_in, fan_out), jnp.float32, -bound, bound)
    b = jax.random.uniform(kb, (1, fan_out), jnp.float32, -bound, bound)
    return w, b


def init_cell_params(key, n_nodes, channels_pp, channels_p, out_shape):
    C = out_shape
    params = {}
    key, k0, k1 = jax.random.split(key, 3)
    pre0_w, pre0_b = _linear_init(k0, channels_pp, C)
    pre1_w, pre1_b = _linear_init(k1, channels_p, C)
    params["pre0_w"], params["pre0_b"] = pre0_w, pre0_b
    params["pre1_w"], params["pre1_b"] = pre1_w, pre1_b

    # BatchNorm1d defaults, folded (eval mode):
    #   scale = gamma / sqrt(var + eps),  shift = beta - mean * scale
    ones = jnp.ones((1, C), jnp.float32)
    zeros = jnp.zeros((1, C), jnp.float32)
    scale = ones / jnp.sqrt(ones + BN_EPS)
    shift = zeros
    params["pre0_scale"], params["pre0_shift"] = scale, shift
    params["pre1_scale"], params["pre1_shift"] = scale, shift

    # BN folded into the preprocess linear (what the fused kernel consumes).
    params["pre0_wf"] = pre0_w * scale
    params["pre0_bf"] = pre0_b * scale + shift
    params["pre1_wf"] = pre1_w * scale
    params["pre1_bf"] = pre1_b * scale + shift

    # One LayerChoice per (node, prev-node); only the two chosen per node are used
    # at forward time, but all are created (matching the module's __init__ structure).
    params["node_ops"] = []
    params["node_fused"] = []
    for node_idx in range(n_nodes):
        depth = node_idx + 2
        ops = []
        for i in range(depth):
            key, kop = jax.random.split(key)
            ops.append(_linear_init(kop, C, C))
        params["node_ops"].append(ops)

        # Fused params for the two chosen ops (last two previous nodes):
        # block-diagonal weight (2C, 2C) and concatenated bias (1, 2C).
        i0, i1 = depth - 2, depth - 1
        (w0, b0) = ops[i0]
        (w1, b1) = ops[i1]
        w_bd = jnp.zeros((2 * C, 2 * C), jnp.float32)
        w_bd = w_bd.at[:C, :C].set(w0)
        w_bd = w_bd.at[C:, C:].set(w1)
        b_cat = jnp.concatenate([b0, b1], axis=1)
        params["node_fused"].append((w_bd, b_cat))
    return params


# ----------------------------- reference (pure JAX) for sanity ------------------


def _swish(x):
    return x * jax.nn.sigmoid(x)


def cell_forward_ref(params, s0, s1, n_nodes):
    t0 = _swish((s0 @ params["pre0_w"] + params["pre0_b"]) * params["pre0_scale"]
                + params["pre0_shift"])
    t1 = _swish((s1 @ params["pre1_w"] + params["pre1_b"]) * params["pre1_scale"]
                + params["pre1_shift"])
    tensors = [t0, t1]
    for node_idx in range(n_nodes):
        depth = node_idx + 2
        i0, i1 = depth - 2, depth - 1
        (w0, b0) = params["node_ops"][node_idx][i0]
        (w1, b1) = params["node_ops"][node_idx][i1]
        cur = _swish(tensors[i0] @ w0 + b0) + _swish(tensors[i1] @ w1 + b1)
        tensors.append(cur)
    return jnp.concatenate(tensors[2:], axis=1)


# ----------------------------- main ----------------------------------------------


if __name__ == "__main__":
    n_nodes = 4
    channels_pp = 16
    channels_p = 24
    out_shape = 32
    batch = 8

    key = jax.random.PRNGKey(0)
    key, ks0, ks1, kp = jax.random.split(key, 4)
    s0 = jax.random.normal(ks0, (batch, channels_pp), jnp.float32)
    s1 = jax.random.normal(ks1, (batch, channels_p), jnp.float32)

    params = init_cell_params(kp, n_nodes, channels_pp, channels_p, out_shape)

    out = cell_forward(params, s0, s1, n_nodes, out_shape)
    out = jax.block_until_ready(out)

    ref = cell_forward_ref(params, s0, s1, n_nodes)
    assert out.shape == (batch, n_nodes * out_shape), out.shape
    assert jnp.allclose(out, ref, atol=1e-5, rtol=1e-5), "mismatch vs JAX reference"

    print("KERNEL_OK")
</pallas_src>

<mosaic_0001>
module attributes {stable_mosaic.version = 11 : i64} {
  func.func @cell_kernel(%arg0: memref<8x16xf32, #tpu.memory_space<vmem>>, %arg1: memref<8x24xf32, #tpu.memory_space<vmem>>, %arg2: memref<16x32xf32, #tpu.memory_space<vmem>>, %arg3: memref<1x32xf32, #tpu.memory_space<vmem>>, %arg4: memref<24x32xf32, #tpu.memory_space<vmem>>, %arg5: memref<1x32xf32, #tpu.memory_space<vmem>>, %arg6: memref<64x64xf32, #tpu.memory_space<vmem>>, %arg7: memref<1x64xf32, #tpu.memory_space<vmem>>, %arg8: memref<64x64xf32, #tpu.memory_space<vmem>>, %arg9: memref<1x64xf32, #tpu.memory_space<vmem>>, %arg10: memref<64x64xf32, #tpu.memory_space<vmem>>, %arg11: memref<1x64xf32, #tpu.memory_space<vmem>>, %arg12: memref<64x64xf32, #tpu.memory_space<vmem>>, %arg13: memref<1x64xf32, #tpu.memory_space<vmem>>, %arg14: memref<8x128xf32, #tpu.memory_space<vmem>>) attributes {dimension_semantics = [], scalar_prefetch = 0 : i64, scratch_operands = 0 : i64, tpu.core_type = #tpu.core_type<tc>} {
    %c0 = arith.constant 0 : index
    %c0_0 = arith.constant 0 : index
    %0 = vector.load %arg0[%c0, %c0_0] : memref<8x16xf32, #tpu.memory_space<vmem>>, vector<8x16xf32>
    %c0_1 = arith.constant 0 : index
    %c0_2 = arith.constant 0 : index
    %1 = vector.load %arg2[%c0_1, %c0_2] : memref<16x32xf32, #tpu.memory_space<vmem>>, vector<16x32xf32>
    %cst = arith.constant dense<0.000000e+00> : vector<8x32xf32>
    %2 = tpu.matmul %0, %1, %cst {dimension_numbers = #tpu.dot_dimension_numbers<[1], [0], [0], [1], [0, 0, 1, 1], [], []>} : vector<8x16xf32>, vector<16x32xf32>, vector<8x32xf32> -> vector<8x32xf32>
    %c0_3 = arith.constant 0 : index
    %c0_4 = arith.constant 0 : index
    %3 = vector.load %arg3[%c0_3, %c0_4] : memref<1x32xf32, #tpu.memory_space<vmem>>, vector<1x32xf32>
    %4 = vector.broadcast %3 : vector<1x32xf32> to vector<8x32xf32>
    %5 = arith.addf %2, %4 : vector<8x32xf32>
    %6 = arith.negf %5 : vector<8x32xf32>
    %7 = math.exp %6 : vector<8x32xf32>
    %cst_5 = arith.constant 1.000000e+00 : f32
    %8 = vector.broadcast %cst_5 : f32 to vector<8x32xf32>
    %9 = arith.addf %8, %7 : vector<8x32xf32>
    %10 = arith.divf %8, %9 : vector<8x32xf32>
    %11 = arith.mulf %5, %10 : vector<8x32xf32>
    %c0_6 = arith.constant 0 : index
    %c0_7 = arith.constant 0 : index
    %12 = vector.load %arg1[%c0_6, %c0_7] : memref<8x24xf32, #tpu.memory_space<vmem>>, vector<8x24xf32>
    %c0_8 = arith.constant 0 : index
    %c0_9 = arith.constant 0 : index
    %13 = vector.load %arg4[%c0_8, %c0_9] : memref<24x32xf32, #tpu.memory_space<vmem>>, vector<24x32xf32>
    %cst_10 = arith.constant dense<0.000000e+00> : vector<8x32xf32>
    %14 = tpu.matmul %12, %13, %cst_10 {dimension_numbers = #tpu.dot_dimension_numbers<[1], [0], [0], [1], [0, 0, 1, 1], [], []>} : vector<8x24xf32>, vector<24x32xf32>, vector<8x32xf32> -> vector<8x32xf32>
    %c0_11 = arith.constant 0 : index
    %c0_12 = arith.constant 0 : index
    %15 = vector.load %arg5[%c0_11, %c0_12] : memref<1x32xf32, #tpu.memory_space<vmem>>, vector<1x32xf32>
    %16 = vector.broadcast %15 : vector<1x32xf32> to vector<8x32xf32>
    %17 = arith.addf %14, %16 : vector<8x32xf32>
    %18 = arith.negf %17 : vector<8x32xf32>
    %19 = math.exp %18 : vector<8x32xf32>
    %cst_13 = arith.constant 1.000000e+00 : f32
    %20 = vector.broadcast %cst_13 : f32 to vector<8x32xf32>
    %21 = arith.addf %20, %19 : vector<8x32xf32>
    %22 = arith.divf %20, %21 : vector<8x32xf32>
    %23 = arith.mulf %17, %22 : vector<8x32xf32>
    %24 = tpu.concatenate %11, %23 in 1 : vector<8x32xf32>, vector<8x32xf32> -> vector<8x64xf32>
    %c0_14 = arith.constant 0 : index
    %c0_15 = arith.constant 0 : index
    %25 = vector.load %arg6[%c0_14, %c0_15] : memref<64x64xf32, #tpu.memory_space<vmem>>, vector<64x64xf32>
    %cst_16 = arith.constant dense<0.000000e+00> : vector<8x64xf32>
    %26 = tpu.matmul %24, %25, %cst_16 {dimension_numbers = #tpu.dot_dimension_numbers<[1], [0], [0], [1], [0, 0, 1, 1], [], []>} : vector<8x64xf32>, vector<64x64xf32>, vector<8x64xf32> -> vector<8x64xf32>
    %c0_17 = arith.constant 0 : index
    %c0_18 = arith.constant 0 : index
    %27 = vector.load %arg7[%c0_17, %c0_18] : memref<1x64xf32, #tpu.memory_space<vmem>>, vector<1x64xf32>
    %28 = vector.broadcast %27 : vector<1x64xf32> to vector<8x64xf32>
    %29 = arith.addf %26, %28 : vector<8x64xf32>
    %30 = arith.negf %29 : vector<8x64xf32>
    %31 = math.exp %30 : vector<8x64xf32>
    %cst_19 = arith.constant 1.000000e+00 : f32
    %32 = vector.broadcast %cst_19 : f32 to vector<8x64xf32>
    %33 = arith.addf %32, %31 : vector<8x64xf32>
    %34 = arith.divf %32, %33 : vector<8x64xf32>
    %35 = arith.mulf %29, %34 : vector<8x64xf32>
    %36 = vector.extract_strided_slice %35 {offsets = [0, 0], sizes = [8, 32], strides = [1, 1]} : vector<8x64xf32> to vector<8x32xf32>
    %37 = vector.extract_strided_slice %35 {offsets = [0, 32], sizes = [8, 32], strides = [1, 1]} : vector<8x64xf32> to vector<8x32xf32>
    %38 = arith.addf %36, %37 : vector<8x32xf32>
    %c0_20 = arith.constant 0 : index
    %c0_21 = arith.constant 0 : index
    %39 = vector.load %arg14[%c0_20, %c0_21] : memref<8x128xf32, #tpu.memory_space<vmem>>, vector<8x32xf32>
    tpu.vector_store %arg14[%c0_20, %c0_21], %38 {strides = array<i32>} : memref<8x128xf32, #tpu.memory_space<vmem>>, vector<8x32xf32>,
    %40 = tpu.concatenate %23, %38 in 1 : vector<8x32xf32>, vector<8x32xf32> -> vector<8x64xf32>
    %c0_22 = arith.constant 0 : index
    %c0_23 = arith.constant 0 : index
    %41 = vector.load %arg8[%c0_22, %c0_23] : memref<64x64xf32, #tpu.memory_space<vmem>>, vector<64x64xf32>
    %cst_24 = arith.constant dense<0.000000e+00> : vector<8x64xf32>
    %42 = tpu.matmul %40, %41, %cst_24 {dimension_numbers = #tpu.dot_dimension_numbers<[1], [0], [0], [1], [0, 0, 1, 1], [], []>} : vector<8x64xf32>, vector<64x64xf32>, vector<8x64xf32> -> vector<8x64xf32>
    %c0_25 = arith.constant 0 : index
    %c0_26 = arith.constant 0 : index
    %43 = vector.load %arg9[%c0_25, %c0_26] : memref<1x64xf32, #tpu.memory_space<vmem>>, vector<1x64xf32>
    %44 = vector.broadcast %43 : vector<1x64xf32> to vector<8x64xf32>
    %45 = arith.addf %42, %44 : vector<8x64xf32>
    %46 = arith.negf %45 : vector<8x64xf32>
    %47 = math.exp %46 : vector<8x64xf32>
    %cst_27 = arith.constant 1.000000e+00 : f32
    %48 = vector.broadcast %cst_27 : f32 to vector<8x64xf32>
    %49 = arith.addf %48, %47 : vector<8x64xf32>
    %50 = arith.divf %48, %49 : vector<8x64xf32>
    %51 = arith.mulf %45, %50 : vector<8x64xf32>
    %52 = vector.extract_strided_slice %51 {offsets = [0, 0], sizes = [8, 32], strides = [1, 1]} : vector<8x64xf32> to vector<8x32xf32>
    %53 = vector.extract_strided_slice %51 {offsets = [0, 32], sizes = [8, 32], strides = [1, 1]} : vector<8x64xf32> to vector<8x32xf32>
    %54 = arith.addf %52, %53 : vector<8x32xf32>
    %c0_28 = arith.constant 0 : index
    %c32 = arith.constant 32 : index
    %55 = vector.load %arg14[%c0_28, %c32] : memref<8x128xf32, #tpu.memory_space<vmem>>, vector<8x32xf32>
    tpu.vector_store %arg14[%c0_28, %c32], %54 {strides = array<i32>} : memref<8x128xf32, #tpu.memory_space<vmem>>, vector<8x32xf32>,
    %56 = tpu.concatenate %38, %54 in 1 : vector<8x32xf32>, vector<8x32xf32> -> vector<8x64xf32>
    %c0_29 = arith.constant 0 : index
    %c0_30 = arith.constant 0 : index
    %57 = vector.load %arg10[%c0_29, %c0_30] : memref<64x64xf32, #tpu.memory_space<vmem>>, vector<64x64xf32>
    %cst_31 = arith.constant dense<0.000000e+00> : vector<8x64xf32>
    %58 = tpu.matmul %56, %57, %cst_31 {dimension_numbers = #tpu.dot_dimension_numbers<[1], [0], [0], [1], [0, 0, 1, 1], [], []>} : vector<8x64xf32>, vector<64x64xf32>, vector<8x64xf32> -> vector<8x64xf32>
    %c0_32 = arith.constant 0 : index
    %c0_33 = arith.constant 0 : index
    %59 = vector.load %arg11[%c0_32, %c0_33] : memref<1x64xf32, #tpu.memory_space<vmem>>, vector<1x64xf32>
    %60 = vector.broadcast %59 : vector<1x64xf32> to vector<8x64xf32>
    %61 = arith.addf %58, %60 : vector<8x64xf32>
    %62 = arith.negf %61 : vector<8x64xf32>
    %63 = math.exp %62 : vector<8x64xf32>
    %cst_34 = arith.constant 1.000000e+00 : f32
    %64 = vector.broadcast %cst_34 : f32 to vector<8x64xf32>
    %65 = arith.addf %64, %63 : vector<8x64xf32>
    %66 = arith.divf %64, %65 : vector<8x64xf32>
    %67 = arith.mulf %61, %66 : vector<8x64xf32>
    %68 = vector.extract_strided_slice %67 {offsets = [0, 0], sizes = [8, 32], strides = [1, 1]} : vector<8x64xf32> to vector<8x32xf32>
    %69 = vector.extract_strided_slice %67 {offsets = [0, 32], sizes = [8, 32], strides = [1, 1]} : vector<8x64xf32> to vector<8x32xf32>
    %70 = arith.addf %68, %69 : vector<8x32xf32>
    %c0_35 = arith.constant 0 : index
    %c64 = arith.constant 64 : index
    %71 = vector.load %arg14[%c0_35, %c64] : memref<8x128xf32, #tpu.memory_space<vmem>>, vector<8x32xf32>
    tpu.vector_store %arg14[%c0_35, %c64], %70 {strides = array<i32>} : memref<8x128xf32, #tpu.memory_space<vmem>>, vector<8x32xf32>,
    %72 = tpu.concatenate %54, %70 in 1 : vector<8x32xf32>, vector<8x32xf32> -> vector<8x64xf32>
    %c0_36 = arith.constant 0 : index
    %c0_37 = arith.constant 0 : index
    %73 = vector.load %arg12[%c0_36, %c0_37] : memref<64x64xf32, #tpu.memory_space<vmem>>, vector<64x64xf32>
    %cst_38 = arith.constant dense<0.000000e+00> : vector<8x64xf32>
    %74 = tpu.matmul %72, %73, %cst_38 {dimension_numbers = #tpu.dot_dimension_numbers<[1], [0], [0], [1], [0, 0, 1, 1], [], []>} : vector<8x64xf32>, vector<64x64xf32>, vector<8x64xf32> -> vector<8x64xf32>
    %c0_39 = arith.constant 0 : index
    %c0_40 = arith.constant 0 : index
    %75 = vector.load %arg13[%c0_39, %c0_40] : memref<1x64xf32, #tpu.memory_space<vmem>>, vector<1x64xf32>
    %76 = vector.broadcast %75 : vector<1x64xf32> to vector<8x64xf32>
    %77 = arith.addf %74, %76 : vector<8x64xf32>
    %78 = arith.negf %77 : vector<8x64xf32>
    %79 = math.exp %78 : vector<8x64xf32>
    %cst_41 = arith.constant 1.000000e+00 : f32
    %80 = vector.broadcast %cst_41 : f32 to vector<8x64xf32>
    %81 = arith.addf %80, %79 : vector<8x64xf32>
    %82 = arith.divf %80, %81 : vector<8x64xf32>
    %83 = arith.mulf %77, %82 : vector<8x64xf32>
    %84 = vector.extract_strided_slice %83 {offsets = [0, 0], sizes = [8, 32], strides = [1, 1]} : vector<8x64xf32> to vector<8x32xf32>
    %85 = vector.extract_strided_slice %83 {offsets = [0, 32], sizes = [8, 32], strides = [1, 1]} : vector<8x64xf32> to vector<8x32xf32>
    %86 = arith.addf %84, %85 : vector<8x32xf32>
    %c0_42 = arith.constant 0 : index
    %c96 = arith.constant 96 : index
    %87 = vector.load %arg14[%c0_42, %c96] : memref<8x128xf32, #tpu.memory_space<vmem>>, vector<8x32xf32>
    tpu.vector_store %arg14[%c0_42, %c96], %86 {strides = array<i32>} : memref<8x128xf32, #tpu.memory_space<vmem>>, vector<8x32xf32>,
    return
  }
}

</mosaic_0001>

<llo_original>
// kernel: tpu_custom_call.1
$region0: #{tpu_custom_call.1}
  #allocation0 [shape = 'u32[]', space=smem, size = 0x4, offset = 0x4, fixed_abs, tag = 'smem constant byte address 0x4 - core index']
  #allocation1 [shape = 'u32[144,128]{1,0:T(1,128)}', space=vmem, size = 0x12000, scoped, tag = 'internal scratch']
  %s0 = inlined_call_operand.hbm [shape: f32[8,16], index: 0, kind: input, shape index: {}]
  %s1 = inlined_call_operand.hbm [shape: f32[8,24], index: 1, kind: input, shape index: {}]
  %s2 = inlined_call_operand.hbm [shape: f32[16,32], index: 2, kind: input, shape index: {}]
  %s3 = inlined_call_operand.vmem [shape: f32[1,32], index: 3, kind: input, shape index: {}]
  %s4 = inlined_call_operand.hbm [shape: f32[24,32], index: 4, kind: input, shape index: {}]
  %s5 = inlined_call_operand.vmem [shape: f32[1,32], index: 5, kind: input, shape index: {}]
  %s6 = inlined_call_operand.hbm [shape: f32[64,64], index: 6, kind: input, shape index: {}]
  %s7 = inlined_call_operand.vmem [shape: f32[1,64], index: 7, kind: input, shape index: {}]
  %s8 = inlined_call_operand.hbm [shape: f32[64,64], index: 8, kind: input, shape index: {}]
  %s9 = inlined_call_operand.vmem [shape: f32[1,64], index: 9, kind: input, shape index: {}]
  %s10 = inlined_call_operand.hbm [shape: f32[64,64], index: 10, kind: input, shape index: {}]
  %s11 = inlined_call_operand.vmem [shape: f32[1,64], index: 11, kind: input, shape index: {}]
  %s12 = inlined_call_operand.hbm [shape: f32[64,64], index: 12, kind: input, shape index: {}]
  %s13 = inlined_call_operand.vmem [shape: f32[1,64], index: 13, kind: input, shape index: {}]
  %s14 = inlined_call_operand.hbm [shape: f32[8,128], index: 14, kind: output, shape index: {}]
  %s15 = sld [smem:[#allocation0]]
  $region98: #{tpu_custom_call.1} parent=0
    _
  %s17 = ssub.s32 1, %s15
  %s18 = scalar_select 0, %s17, %s15
  $region1: #{tpu_custom_call.1} parent=0
    #allocation2 [shape = 'u8[4096]{0}', space=vmem, size = 0x1000, scoped, tag = 'input window, operand 0, single buffered']
    #allocation3 [shape = 's32[1]{0}', space=sflag, size = 0x4, scoped, tag = 'scoped memory for tpu_custom_call.1']
    #allocation4 [shape = 's32[1]{0}', space=sflag, size = 0x4, scoped, tag = 'scoped memory for tpu_custom_call.1']
    #allocation5 [shape = 'u8[4096]{0}', space=vmem, size = 0x1000, scoped, tag = 'input window, operand 1, single buffered']
    #allocation6 [shape = 's32[1]{0}', space=sflag, size = 0x4, scoped, tag = 'scoped memory for tpu_custom_call.1']
    #allocation7 [shape = 'u8[8192]{0}', space=vmem, size = 0x2000, scoped, tag = 'input window, operand 2, single buffered']
    #allocation8 [shape = 'u8[12288]{0}', space=vmem, size = 0x3000, scoped, tag = 'input window, operand 4, single buffered']
    #allocation9 [shape = 's32[1]{0}', space=sflag, size = 0x4, scoped, tag = 'scoped memory for tpu_custom_call.1']
    #allocation10 [shape = 'u8[32768]{0}', space=vmem, size = 0x8000, scoped, tag = 'input window, operand 6, single buffered']
    #allocation11 [shape = 'u8[32768]{0}', space=vmem, size = 0x8000, scoped, tag = 'input window, operand 8, single buffered']
    #allocation12 [shape = 's32[1]{0}', space=sflag, size = 0x4, scoped, tag = 'scoped memory for tpu_custom_call.1']
    #allocation13 [shape = 'u8[32768]{0}', space=vmem, size = 0x8000, scoped, tag = 'input window, operand 10, single buffered']
    #allocation14 [shape = 'u8[32768]{0}', space=vmem, size = 0x8000, scoped, tag = 'input window, operand 12, single buffered']
    #allocation15 [shape = 's32[1]{0}', space=sflag, size = 0x4, scoped, tag = 'scoped memory for tpu_custom_call.1']
    #allocation16 [shape = 'u8[4096]{0}', space=vmem, size = 0x1000, scoped, tag = 'output window, operand 0, single buffered']
    %19 = vsyncpa [#allocation3], 0
    %20 = vsyncpa [#allocation6], 0
    %21 = vsyncpa [#allocation9], 0
    %22 = vsyncpa [#allocation12], 0
    %23 = vsyncpa [#allocation15], 0
    %24 = vsyncpa [#allocation4], 0
    // Predicated region
    $region2: #{tpu_custom_call.1} parent=1 // pred_check
      _
    $region3: #{tpu_custom_call.1} parent=1 // pred_check_branch
      %26 = sbr.rel (0) target = $region5
    $region4: #{tpu_custom_call.1} parent=1 // pred_region
      %s28 = ssub.s32 128, 128
      %29 = vsyncadd [#allocation3], %s28
      %s31 = sshll.u32 [#allocation2], 4
      %s32 = int_to_ptr.vmem [resolvable:$true] %s31
      %34 = dma.hbm_to_vmem [thread:$0]  %s0, 128, %s32, [#allocation3]
    $region5: #{tpu_custom_call.1} parent=1 // pred_fallthru
      _
    // Predicated region
    $region6: #{tpu_custom_call.1} parent=1 // pred_check
      _
    $region7: #{tpu_custom_call.1} parent=1 // pred_check_branch
      %36 = sbr.rel (0) target = $region9
    $region8: #{tpu_custom_call.1} parent=1 // pred_region
      %s38 = ssub.s32 128, 128
      %39 = vsyncadd [#allocation6], %s38
      %s41 = sshll.u32 [#allocation5], 4
      %s42 = int_to_ptr.vmem [resolvable:$true] %s41
      %44 = dma.hbm_to_vmem [thread:$0]  %s1, 128, %s42, [#allocation6]
    $region9: #{tpu_custom_call.1} parent=1 // pred_fallthru
      _
    // Predicated region
    $region10: #{tpu_custom_call.1} parent=1 // pred_check
      _
    $region11: #{tpu_custom_call.1} parent=1 // pred_check_branch
      %46 = sbr.rel (0) target = $region13
    $region12: #{tpu_custom_call.1} parent=1 // pred_region
      %s48 = ssub.s32 256, 256
      %49 = vsyncadd [#allocation6], %s48
      %s50 = sshll.u32 [#allocation7], 4
      %s51 = int_to_ptr.vmem [resolvable:$true] %s50
      %56 = dma.hbm_to_vmem [thread:$0]  %s2, 256, %s51, [#allocation6], 128, 128, 8
    $region13: #{tpu_custom_call.1} parent=1 // pred_fallthru
      _
    // Predicated region
    $region14: #{tpu_custom_call.1} parent=1 // pred_check
      _
    $region15: #{tpu_custom_call.1} parent=1 // pred_check_branch
      %58 = sbr.rel (0) target = $region17
    $region16: #{tpu_custom_call.1} parent=1 // pred_region
      _
    $region17: #{tpu_custom_call.1} parent=1 // pred_fallthru
      _
    // Predicated region
    $region18: #{tpu_custom_call.1} parent=1 // pred_check
      _
    $region19: #{tpu_custom_call.1} parent=1 // pred_check_branch
      %60 = sbr.rel (0) target = $region21
    $region20: #{tpu_custom_call.1} parent=1 // pred_region
      %s62 = ssub.s32 384, 384
      %63 = vsyncadd [#allocation9], %s62
      %s64 = sshll.u32 [#allocation8], 4
      %s65 = int_to_ptr.vmem [resolvable:$true] %s64
      %70 = dma.hbm_to_vmem [thread:$0]  %s4, 384, %s65, [#allocation9], 128, 128, 8
    $region21: #{tpu_custom_call.1} parent=1 // pred_fallthru
      _
    // Predicated region
    $region22: #{tpu_custom_call.1} parent=1 // pred_check
      _
    $region23: #{tpu_custom_call.1} parent=1 // pred_check_branch
      %72 = sbr.rel (0) target = $region25
    $region24: #{tpu_custom_call.1} parent=1 // pred_region
      _
    $region25: #{tpu_custom_call.1} parent=1 // pred_fallthru
      _
    // Predicated region
    $region26: #{tpu_custom_call.1} parent=1 // pred_check
      _
    $region27: #{tpu_custom_call.1} parent=1 // pred_check_branch
      %74 = sbr.rel (0) target = $region29
    $region28: #{tpu_custom_call.1} parent=1 // pred_region
      %s76 = ssub.s32 1024, 1024
      %77 = vsyncadd [#allocation9], %s76
      %s78 = sshll.u32 [#allocation10], 4
      %s79 = int_to_ptr.vmem [resolvable:$true] %s78
      %84 = dma.hbm_to_vmem [thread:$0]  %s6, 1024, %s79, [#allocation9], 128, 128, 8
    $region29: #{tpu_custom_call.1} parent=1 // pred_fallthru
      _
    // Predicated region
    $region30: #{tpu_custom_call.1} parent=1 // pred_check
      _
    $region31: #{tpu_custom_call.1} parent=1 // pred_check_branch
      %86 = sbr.rel (0) target = $region33
    $region32: #{tpu_custom_call.1} parent=1 // pred_region
      _
    $region33: #{tpu_custom_call.1} parent=1 // pred_fallthru
      _
    // Predicated region
    $region34: #{tpu_custom_call.1} parent=1 // pred_check
      _
    $region35: #{tpu_custom_call.1} parent=1 // pred_check_branch
      %88 = sbr.rel (0) target = $region37
    $region36: #{tpu_custom_call.1} parent=1 // pred_region
      %s90 = ssub.s32 1024, 1024
      %91 = vsyncadd [#allocation12], %s90
      %s92 = sshll.u32 [#allocation11], 4
      %s93 = int_to_ptr.vmem [resolvable:$true] %s92
      %98 = dma.hbm_to_vmem [thread:$0]  %s8, 1024, %s93, [#allocation12], 128, 128, 8
    $region37: #{tpu_custom_call.1} parent=1 // pred_fallthru
      _
    // Predicated region
    $region38: #{tpu_custom_call.1} parent=1 // pred_check
      _
    $region39: #{tpu_custom_call.1} parent=1 // pred_check_branch
      %100 = sbr.rel (0) target = $region41
    $region40: #{tpu_custom_call.1} parent=1 // pred_region
      _
    $region41: #{tpu_custom_call.1} parent=1 // pred_fallthru
      _
    // Predicated region
    $region42: #{tpu_custom_call.1} parent=1 // pred_check
      _
    $region43: #{tpu_custom_call.1} parent=1 // pred_check_branch
      %102 = sbr.rel (0) target = $region45
    $region44: #{tpu_custom_call.1} parent=1 // pred_region
      %s104 = ssub.s32 1024, 1024
      %105 = vsyncadd [#allocation12], %s104
      %s106 = sshll.u32 [#allocation13], 4
      %s107 = int_to_ptr.vmem [resolvable:$true] %s106
      %112 = dma.hbm_to_vmem [thread:$0]  %s10, 1024, %s107, [#allocation12], 128, 128, 8
    $region45: #{tpu_custom_call.1} parent=1 // pred_fallthru
      _
    // Predicated region
    $region46: #{tpu_custom_call.1} parent=1 // pred_check
      _
    $region47: #{tpu_custom_call.1} parent=1 // pred_check_branch
      %114 = sbr.rel (0) target = $region49
    $region48: #{tpu_custom_call.1} parent=1 // pred_region
      _
    $region49: #{tpu_custom_call.1} parent=1 // pred_fallthru
      _
    // Predicated region
    $region50: #{tpu_custom_call.1} parent=1 // pred_check
      _
    $region51: #{tpu_custom_call.1} parent=1 // pred_check_branch
      %116 = sbr.rel (0) target = $region53
    $region52: #{tpu_custom_call.1} parent=1 // pred_region
      %s118 = ssub.s32 1024, 1024
      %119 = vsyncadd [#allocation15], %s118
      %s120 = sshll.u32 [#allocation14], 4
      %s121 = int_to_ptr.vmem [resolvable:$true] %s120
      %126 = dma.hbm_to_vmem [thread:$0]  %s12, 1024, %s121, [#allocation15], 128, 128, 8
    $region53: #{tpu_custom_call.1} parent=1 // pred_fallthru
      _
    // Predicated region
    $region54: #{tpu_custom_call.1} parent=1 // pred_check
      _
    $region55: #{tpu_custom_call.1} parent=1 // pred_check_branch
      %128 = sbr.rel (0) target = $region57
    $region56: #{tpu_custom_call.1} parent=1 // pred_region
      _
    $region57: #{tpu_custom_call.1} parent=1 // pred_fallthru
      _
    // Predicated region
    $region58: #{tpu_custom_call.1} parent=1 // pred_check
      _
    $region59: #{tpu_custom_call.1} parent=1 // pred_check_branch
      %130 = sbr.rel (0) target = $region61
    $region60: #{tpu_custom_call.1} parent=1 // pred_region
      %131 = dma.done [#allocation3], 128
    $region61: #{tpu_custom_call.1} parent=1 // pred_fallthru
      _
    // Predicated region
    $region62: #{tpu_custom_call.1} parent=1 // pred_check
      _
    $region63: #{tpu_custom_call.1} parent=1 // pred_check_branch
      %133 = sbr.rel (0) target = $region65
    $region64: #{tpu_custom_call.1} parent=1 // pred_region
      %134 = dma.done [#allocation6], 128
    $region65: #{tpu_custom_call.1} parent=1 // pred_fallthru
      _
    // Predicated region
    $region66: #{tpu_custom_call.1} parent=1 // pred_check
      _
    $region67: #{tpu_custom_call.1} parent=1 // pred_check_branch
      %136 = sbr.rel (0) target = $region69
    $region68: #{tpu_custom_call.1} parent=1 // pred_region
      %137 = dma.done [#allocation6], 256
    $region69: #{tpu_custom_call.1} parent=1 // pred_fallthru
      _
    // Predicated region
    $region70: #{tpu_custom_call.1} parent=1 // pred_check
      _
    $region71: #{tpu_custom_call.1} parent=1 // pred_check_branch
      %139 = sbr.rel (0) target = $region73
    $region72: #{tpu_custom_call.1} parent=1 // pred_region
      %140 = dma.done [#allocation9], 384
    $region73: #{tpu_custom_call.1} parent=1 // pred_fallthru
      _
    // Predicated region
    $region74: #{tpu_custom_call.1} parent=1 // pred_check
      _
    $region75: #{tpu_custom_call.1} parent=1 // pred_check_branch
      %142 = sbr.rel (0) target = $region77
    $region76: #{tpu_custom_call.1} parent=1 // pred_region
      %143 = dma.done [#allocation9], 1024
    $region77: #{tpu_custom_call.1} parent=1 // pred_fallthru
      _
    // Predicated region
    $region78: #{tpu_custom_call.1} parent=1 // pred_check
      _
    $region79: #{tpu_custom_call.1} parent=1 // pred_check_branch
      %145 = sbr.rel (0) target = $region81
    $region80: #{tpu_custom_call.1} parent=1 // pred_region
      %146 = dma.done [#allocation12], 1024
    $region81: #{tpu_custom_call.1} parent=1 // pred_fallthru
      _
    // Predicated region
    $region82: #{tpu_custom_call.1} parent=1 // pred_check
      _
    $region83: #{tpu_custom_call.1} parent=1 // pred_check_branch
      %148 = sbr.rel (0) target = $region85
    $region84: #{tpu_custom_call.1} parent=1 // pred_region
      %149 = dma.done [#allocation12], 1024
    $region85: #{tpu_custom_call.1} parent=1 // pred_fallthru
      _
    // Predicated region
    $region86: #{tpu_custom_call.1} parent=1 // pred_check
      _
    $region87: #{tpu_custom_call.1} parent=1 // pred_check_branch
      %151 = sbr.rel (0) target = $region89
    $region88: #{tpu_custom_call.1} parent=1 // pred_region
      %152 = dma.done [#allocation15], 1024
    $region89: #{tpu_custom_call.1} parent=1 // pred_fallthru
      _
    %v153 = vld [vmem:[#allocation2] sm:$0xff]
    %v154 = vld [vmem:[#allocation7] sm:$0xff]
    %v155 = vld [vmem:[#allocation7 + $0x8] sm:$0xff]
    %v156 = vld [vmem:[%s3] sm:$0x1]
    %v158 = vlaneseq
    %v159 = vshrl.u32 %v158, 7
    %v160 = vsub.s32 0, %v159
    %v161 = vrot.slane %v156, %v160
    %vm163 = vcmask 130048
    %v165 = vsel %vm163, %v153, 0
    %167 = vmatprep.subr.mxu0 0.0
    %168 = vmatpush1.msra.mxu0 0.0
    %169 = vmatprep.subr.mxu0 0.0
    %170 = vmatpush1.msra.mxu0 0.0
    %171 = vmatprep.subr.mxu0 0.0
    %172 = vmatpush1.msra.mxu0 0.0
    %173 = vmatprep.subr.mxu0 0.0
    %174 = vmatpush1.msra.mxu0 0.0
    %175 = vmatprep.subr.mxu0 0.0
    %176 = vmatpush1.msra.mxu0 0.0
    %177 = vmatprep.subr.mxu0 0.0
    %178 = vmatpush1.msra.mxu0 0.0
    %179 = vmatprep.subr.mxu0 0.0
    %180 = vmatpush1.msra.mxu0 0.0
    %181 = vmatprep.subr.mxu0 0.0
    %182 = vmatpush1.msra.mxu0 0.0
    %183 = vmatprep.subr.mxu0 0.0
    %184 = vmatpush1.msra.mxu0 0.0
    %185 = vmatprep.subr.mxu0 0.0
    %186 = vmatpush1.msra.mxu0 0.0
    %187 = vmatprep.subr.mxu0 0.0
    %188 = vmatpush1.msra.mxu0 0.0
    %189 = vmatprep.subr.mxu0 0.0
    %190 = vmatpush1.msra.mxu0 0.0
    %191 = vmatprep.subr.mxu0 0.0
    %192 = vmatpush1.msra.mxu0 0.0
    %193 = vmatprep.subr.mxu0 0.0
    %194 = vmatpush1.msra.mxu0 0.0
    %195 = vmatprep.subr.mxu0 0.0
    %196 = vmatpush1.msra.mxu0 %v155
    %197 = vmatprep.subr.mxu0 0.0
    %198 = vmatpush1.msra.mxu0 %v154
    %199 = vmatprep.subr.mxu0 0.0
    %200 = vmatpush2.msra.mxu0 0.0
    %201 = vmatprep.subr.mxu0 0.0
    %202 = vmatpush2.msra.mxu0 0.0
    %203 = vmatprep.subr.mxu0 0.0
    %204 = vmatpush2.msra.mxu0 0.0
    %205 = vmatprep.subr.mxu0 0.0
    %206 = vmatpush2.msra.mxu0 0.0
    %207 = vmatprep.subr.mxu0 0.0
    %208 = vmatpush2.msra.mxu0 0.0
    %209 = vmatprep.subr.mxu0 0.0
    %210 = vmatpush2.msra.mxu0 0.0
    %211 = vmatprep.subr.mxu0 0.0
    %212 = vmatpush2.msra.mxu0 0.0
    %213 = vmatprep.subr.mxu0 0.0
    %214 = vmatpush2.msra.mxu0 0.0
    %215 = vmatprep.subr.mxu0 0.0
    %216 = vmatpush2.msra.mxu0 0.0
    %217 = vmatprep.subr.mxu0 0.0
    %218 = vmatpush2.msra.mxu0 0.0
    %219 = vmatprep.subr.mxu0 0.0
    %220 = vmatpush2.msra.mxu0 0.0
    %221 = vmatprep.subr.mxu0 0.0
    %222 = vmatpush2.msra.mxu0 0.0
    %223 = vmatprep.subr.mxu0 0.0
    %224 = vmatpush2.msra.mxu0 0.0
    %225 = vmatprep.subr.mxu0 0.0
    %226 = vmatpush2.msra.mxu0 0.0
    %227 = vmatprep.subr.mxu0 0.0
    %228 = vmatpush2.msra.mxu0 0.0
    %229 = vmatprep.subr.mxu0 0.0
    %230 = vmatpush2.msra.mxu0 0.0
    %231 = vmatprep.mubr.f32.mxu0 0.0
    %232 = vmatmul.mubr.f32.gmra.mxu0 %v165
    %v233 = vpop.f32.mrf.mxu0
    %v234 = vadd.f32 %v161, %v233
    %v235 = vpop.f32.mrf.mxu0
    %236 = vdwg.mxu0
    %v237 = vxor.u32 %v234, 2147483648
    %v238 = vmul.f32 %v237, 1.442695
    %v239 = vpow.pop %v238
    %v240 = vadd.f32 %v239, 1.0
    %v241 = vrcp.pop %v240
    %v242 = vmul.f32 1.0, %v241
    %v243 = vmul.f32 %v234, %v242
    %v244 = vld [vmem:[#allocation5] sm:$0xff]
    %v245 = vld [vmem:[#allocation8] sm:$0xff]
    %v246 = vld [vmem:[#allocation8 + $0x8] sm:$0xff]
    %v247 = vld [vmem:[#allocation8 + $0x10] sm:$0xff]
    %v248 = vld [vmem:[%s5] sm:$0x1]
    %v250 = vlaneseq
    %v251 = vshrl.u32 %v250, 7
    %v252 = vsub.s32 0, %v251
    %v253 = vrot.slane %v248, %v252
    %vm255 = vcmask 195584
    %v257 = vsel %vm255, %v244, 0
    %259 = vmatprep.subr.mxu0 0.0
    %260 = vmatpush1.msra.mxu0 0.0
    %261 = vmatprep.subr.mxu0 0.0
    %262 = vmatpush1.msra.mxu0 0.0
    %263 = vmatprep.subr.mxu0 0.0
    %264 = vmatpush1.msra.mxu0 0.0
    %265 = vmatprep.subr.mxu0 0.0
    %266 = vmatpush1.msra.mxu0 0.0
    %267 = vmatprep.subr.mxu0 0.0
    %268 = vmatpush1.msra.mxu0 0.0
    %269 = vmatprep.subr.mxu0 0.0
    %270 = vmatpush1.msra.mxu0 0.0
    %271 = vmatprep.subr.mxu0 0.0
    %272 = vmatpush1.msra.mxu0 0.0
    %273 = vmatprep.subr.mxu0 0.0
    %274 = vmatpush1.msra.mxu0 0.0
    %275 = vmatprep.subr.mxu0 0.0
    %276 = vmatpush1.msra.mxu0 0.0
    %277 = vmatprep.subr.mxu0 0.0
    %278 = vmatpush1.msra.mxu0 0.0
    %279 = vmatprep.subr.mxu0 0.0
    %280 = vmatpush1.msra.mxu0 0.0
    %281 = vmatprep.subr.mxu0 0.0
    %282 = vmatpush1.msra.mxu0 0.0
    %283 = vmatprep.subr.mxu0 0.0
    %284 = vmatpush1.msra.mxu0 0.0
    %285 = vmatprep.subr.mxu0 0.0
    %286 = vmatpush1.msra.mxu0 %v247
    %287 = vmatprep.subr.mxu0 0.0
    %288 = vmatpush1.msra.mxu0 %v246
    %289 = vmatprep.subr.mxu0 0.0
    %290 = vmatpush1.msra.mxu0 %v245
    %291 = vmatprep.subr.mxu0 0.0
    %292 = vmatpush2.msra.mxu0 0.0
    %293 = vmatprep.subr.mxu0 0.0
    %294 = vmatpush2.msra.mxu0 0.0
    %295 = vmatprep.subr.mxu0 0.0
    %296 = vmatpush2.msra.mxu0 0.0
    %297 = vmatprep.subr.mxu0 0.0
    %298 = vmatpush2.msra.mxu0 0.0
    %299 = vmatprep.subr.mxu0 0.0
    %300 = vmatpush2.msra.mxu0 0.0
    %301 = vmatprep.subr.mxu0 0.0
    %302 = vmatpush2.msra.mxu0 0.0
    %303 = vmatprep.subr.mxu0 0.0
    %304 = vmatpush2.msra.mxu0 0.0
    %305 = vmatprep.subr.mxu0 0.0
    %306 = vmatpush2.msra.mxu0 0.0
    %307 = vmatprep.subr.mxu0 0.0
    %308 = vmatpush2.msra.mxu0 0.0
    %309 = vmatprep.subr.mxu0 0.0
    %310 = vmatpush2.msra.mxu0 0.0
    %311 = vmatprep.subr.mxu0 0.0
    %312 = vmatpush2.msra.mxu0 0.0
    %313 = vmatprep.subr.mxu0 0.0
    %314 = vmatpush2.msra.mxu0 0.0
    %315 = vmatprep.subr.mxu0 0.0
    %316 = vmatpush2.msra.mxu0 0.0
    %317 = vmatprep.subr.mxu0 0.0
    %318 = vmatpush2.msra.mxu0 0.0
    %319 = vmatprep.subr.mxu0 0.0
    %320 = vmatpush2.msra.mxu0 0.0
    %321 = vmatprep.subr.mxu0 0.0
    %322 = vmatpush2.msra.mxu0 0.0
    %323 = vmatprep.mubr.f32.mxu0 0.0
    %324 = vmatmul.mubr.f32.gmra.mxu0 %v257
    %v325 = vpop.f32.mrf.mxu0
    %v326 = vadd.f32 %v253, %v325
    %v327 = vpop.f32.mrf.mxu0
    %328 = vdwg.mxu0
    %v329 = vxor.u32 %v326, 2147483648
    %v330 = vmul.f32 %v329, 1.442695
    %v331 = vpow.pop %v330
    %v332 = vadd.f32 %v331, 1.0
    %v333 = vrcp.pop %v332
    %v334 = vmul.f32 1.0, %v333
    %v335 = vmul.f32 %v326, %v334
    %337 = vrot.lane.b32.xlu0 %v335, 32
    %v338 = vpop.permute.xlu0 %337
    %vm340 = vcmask 261120
    %v341 = vsel %vm340, %v243, %v338
    %v342 = vld [vmem:[#allocation10] sm:$0xff]
    %v343 = vld [vmem:[#allocation10 + $0x8] sm:$0xff]
    %v344 = vld [vmem:[#allocation10 + $0x10] sm:$0xff]
    %v345 = vld [vmem:[#allocation10 + $0x18] sm:$0xff]
    %v346 = vld [vmem:[#allocation10 + $0x20] sm:$0xff]
    %v347 = vld [vmem:[#allocation10 + $0x28] sm:$0xff]
    %v348 = vld [vmem:[#allocation10 + $0x30] sm:$0xff]
    %v349 = vld [vmem:[#allocation10 + $0x38] sm:$0xff]
    %v350 = vld [vmem:[%s7] sm:$0x1]
    %v352 = vlaneseq
    %v353 = vshrl.u32 %v352, 7
    %v354 = vsub.s32 0, %v353
    %v355 = vrot.slane %v350, %v354
    %vm357 = vcmask 523264
    %v359 = vsel %vm357, %v341, 0
    %361 = vmatprep.subr.mxu0 0.0
    %362 = vmatpush1.msra.mxu0 0.0
    %363 = vmatprep.subr.mxu0 0.0
    %364 = vmatpush1.msra.mxu0 0.0
    %365 = vmatprep.subr.mxu0 0.0
    %366 = vmatpush1.msra.mxu0 0.0
    %367 = vmatprep.subr.mxu0 0.0
    %368 = vmatpush1.msra.mxu0 0.0
    %369 = vmatprep.subr.mxu0 0.0
    %370 = vmatpush1.msra.mxu0 0.0
    %371 = vmatprep.subr.mxu0 0.0
    %372 = vmatpush1.msra.mxu0 0.0
    %373 = vmatprep.subr.mxu0 0.0
    %374 = vmatpush1.msra.mxu0 0.0
    %375 = vmatprep.subr.mxu0 0.0
    %376 = vmatpush1.msra.mxu0 0.0
    %377 = vmatprep.subr.mxu0 0.0
    %378 = vmatpush1.msra.mxu0 %v349
    %379 = vmatprep.subr.mxu0 0.0
    %380 = vmatpush1.msra.mxu0 %v348
    %381 = vmatprep.subr.mxu0 0.0
    %382 = vmatpush1.msra.mxu0 %v347
    %383 = vmatprep.subr.mxu0 0.0
    %384 = vmatpush1.msra.mxu0 %v346
    %385 = vmatprep.subr.mxu0 0.0
    %386 = vmatpush1.msra.mxu0 %v345
    %387 = vmatprep.subr.mxu0 0.0
    %388 = vmatpush1.msra.mxu0 %v344
    %389 = vmatprep.subr.mxu0 0.0
    %390 = vmatpush1.msra.mxu0 %v343
    %391 = vmatprep.subr.mxu0 0.0
    %392 = vmatpush1.msra.mxu0 %v342
    %393 = vmatprep.subr.mxu0 0.0
    %394 = vmatpush2.msra.mxu0 0.0
    %395 = vmatprep.subr.mxu0 0.0
    %396 = vmatpush2.msra.mxu0 0.0
    %397 = vmatprep.subr.mxu0 0.0
    %398 = vmatpush2.msra.mxu0 0.0
    %399 = vmatprep.subr.mxu0 0.0
    %400 = vmatpush2.msra.mxu0 0.0
    %401 = vmatprep.subr.mxu0 0.0
    %402 = vmatpush2.msra.mxu0 0.0
    %403 = vmatprep.subr.mxu0 0.0
    %404 = vmatpush2.msra.mxu0 0.0
    %405 = vmatprep.subr.mxu0 0.0
    %406 = vmatpush2.msra.mxu0 0.0
    %407 = vmatprep.subr.mxu0 0.0
    %408 = vmatpush2.msra.mxu0 0.0
    %409 = vmatprep.subr.mxu0 0.0
    %410 = vmatpush2.msra.mxu0 0.0
    %411 = vmatprep.subr.mxu0 0.0
    %412 = vmatpush2.msra.mxu0 0.0
    %413 = vmatprep.subr.mxu0 0.0
    %414 = vmatpush2.msra.mxu0 0.0
    %415 = vmatprep.subr.mxu0 0.0
    %416 = vmatpush2.msra.mxu0 0.0
    %417 = vmatprep.subr.mxu0 0.0
    %418 = vmatpush2.msra.mxu0 0.0
    %419 = vmatprep.subr.mxu0 0.0
    %420 = vmatpush2.msra.mxu0 0.0
    %421 = vmatprep.subr.mxu0 0.0
    %422 = vmatpush2.msra.mxu0 0.0
    %423 = vmatprep.subr.mxu0 0.0
    %424 = vmatpush2.msra.mxu0 0.0
    %425 = vmatprep.mubr.f32.mxu0 0.0
    %426 = vmatmul.mubr.f32.gmra.mxu0 %v359
    %v427 = vpop.f32.mrf.mxu0
    %v428 = vadd.f32 %v355, %v427
    %v429 = vpop.f32.mrf.mxu0
    %430 = vdwg.mxu0
    %v431 = vxor.u32 %v428, 2147483648
    %v432 = vmul.f32 %v431, 1.442695
    %v433 = vpow.pop %v432
    %v434 = vadd.f32 %v433, 1.0
    %v435 = vrcp.pop %v434
    %v436 = vmul.f32 1.0, %v435
    %v437 = vmul.f32 %v428, %v436
    %439 = vrot.lane.b32.xlu0 %v437, 96
    %v440 = vpop.permute.xlu0 %439
    %v442 = vadd.f32 %v437, %v440
    %443 = vst.msk [vmem:[#allocation16] sm:$0xff] %vm340, %v442
    %445 = vrot.lane.b32.xlu0 %v442, 32
    %v446 = vpop.permute.xlu0 %445
    %v448 = vsel %vm340, %v335, %v446
    %v449 = vld [vmem:[#allocation11] sm:$0xff]
    %v450 = vld [vmem:[#allocation11 + $0x8] sm:$0xff]
    %v451 = vld [vmem:[#allocation11 + $0x10] sm:$0xff]
    %v452 = vld [vmem:[#allocation11 + $0x18] sm:$0xff]
    %v453 = vld [vmem:[#allocation11 + $0x20] sm:$0xff]
    %v454 = vld [vmem:[#allocation11 + $0x28] sm:$0xff]
    %v455 = vld [vmem:[#allocation11 + $0x30] sm:$0xff]
    %v456 = vld [vmem:[#allocation11 + $0x38] sm:$0xff]
    %v457 = vld [vmem:[%s9] sm:$0x1]
    %v459 = vlaneseq
    %v460 = vshrl.u32 %v459, 7
    %v461 = vsub.s32 0, %v460
    %v462 = vrot.slane %v457, %v461
    %v465 = vsel %vm357, %v448, 0
    %467 = vmatprep.subr.mxu0 0.0
    %468 = vmatpush1.msra.mxu0 0.0
    %469 = vmatprep.subr.mxu0 0.0
    %470 = vmatpush1.msra.mxu0 0.0
    %471 = vmatprep.subr.mxu0 0.0
    %472 = vmatpush1.msra.mxu0 0.0
    %473 = vmatprep.subr.mxu0 0.0
    %474 = vmatpush1.msra.mxu0 0.0
    %475 = vmatprep.subr.mxu0 0.0
    %476 = vmatpush1.msra.mxu0 0.0
    %477 = vmatprep.subr.mxu0 0.0
    %478 = vmatpush1.msra.mxu0 0.0
    %479 = vmatprep.subr.mxu0 0.0
    %480 = vmatpush1.msra.mxu0 0.0
    %481 = vmatprep.subr.mxu0 0.0
    %482 = vmatpush1.msra.mxu0 0.0
    %483 = vmatprep.subr.mxu0 0.0
    %484 = vmatpush1.msra.mxu0 %v456
    %485 = vmatprep.subr.mxu0 0.0
    %486 = vmatpush1.msra.mxu0 %v455
    %487 = vmatprep.subr.mxu0 0.0
    %488 = vmatpush1.msra.mxu0 %v454
    %489 = vmatprep.subr.mxu0 0.0
    %490 = vmatpush1.msra.mxu0 %v453
    %491 = vmatprep.subr.mxu0 0.0
    %492 = vmatpush1.msra.mxu0 %v452
    %493 = vmatprep.subr.mxu0 0.0
    %494 = vmatpush1.msra.mxu0 %v451
    %495 = vmatprep.subr.mxu0 0.0
    %496 = vmatpush1.msra.mxu0 %v450
    %497 = vmatprep.subr.mxu0 0.0
    %498 = vmatpush1.msra.mxu0 %v449
    %499 = vmatprep.subr.mxu0 0.0
    %500 = vmatpush2.msra.mxu0 0.0
    %501 = vmatprep.subr.mxu0 0.0
    %502 = vmatpush2.msra.mxu0 0.0
    %503 = vmatprep.subr.mxu0 0.0
    %504 = vmatpush2.msra.mxu0 0.0
    %505 = vmatprep.subr.mxu0 0.0
    %506 = vmatpush2.msra.mxu0 0.0
    %507 = vmatprep.subr.mxu0 0.0
    %508 = vmatpush2.msra.mxu0 0.0
    %509 = vmatprep.subr.mxu0 0.0
    %510 = vmatpush2.msra.mxu0 0.0
    %511 = vmatprep.subr.mxu0 0.0
    %512 = vmatpush2.msra.mxu0 0.0
    %513 = vmatprep.subr.mxu0 0.0
    %514 = vmatpush2.msra.mxu0 0.0
    %515 = vmatprep.subr.mxu0 0.0
    %516 = vmatpush2.msra.mxu0 0.0
    %517 = vmatprep.subr.mxu0 0.0
    %518 = vmatpush2.msra.mxu0 0.0
    %519 = vmatprep.subr.mxu0 0.0
    %520 = vmatpush2.msra.mxu0 0.0
    %521 = vmatprep.subr.mxu0 0.0
    %522 = vmatpush2.msra.mxu0 0.0
    %523 = vmatprep.subr.mxu0 0.0
    %524 = vmatpush2.msra.mxu0 0.0
    %525 = vmatprep.subr.mxu0 0.0
    %526 = vmatpush2.msra.mxu0 0.0
    %527 = vmatprep.subr.mxu0 0.0
    %528 = vmatpush2.msra.mxu0 0.0
    %529 = vmatprep.subr.mxu0 0.0
    %530 = vmatpush2.msra.mxu0 0.0
    %531 = vmatprep.mubr.f32.mxu0 0.0
    %532 = vmatmul.mubr.f32.gmra.mxu0 %v465
    %v533 = vpop.f32.mrf.mxu0
    %v534 = vadd.f32 %v462, %v533
    %v535 = vpop.f32.mrf.mxu0
    %536 = vdwg.mxu0
    %v537 = vxor.u32 %v534, 2147483648
    %v538 = vmul.f32 %v537, 1.442695
    %v539 = vpow.pop %v538
    %v540 = vadd.f32 %v539, 1.0
    %v541 = vrcp.pop %v540
    %v542 = vmul.f32 1.0, %v541
    %v543 = vmul.f32 %v534, %v542
    %545 = vrot.lane.b32.xlu0 %v543, 96
    %v546 = vpop.permute.xlu0 %545
    %v548 = vadd.f32 %v543, %v546
    %550 = vrot.lane.b32.xlu0 %v548, 32
    %v551 = vpop.permute.xlu0 %550
    %vm553 = vcmask 523520
    %554 = vst.msk [vmem:[#allocation16] sm:$0xff] %vm553, %v551
    %v555 = vsel %vm340, %v442, %v551
    %v556 = vld [vmem:[#allocation13] sm:$0xff]
    %v557 = vld [vmem:[#allocation13 + $0x8] sm:$0xff]
    %v558 = vld [vmem:[#allocation13 + $0x10] sm:$0xff]
    %v559 = vld [vmem:[#allocation13 + $0x18] sm:$0xff]
    %v560 = vld [vmem:[#allocation13 + $0x20] sm:$0xff]
    %v561 = vld [vmem:[#allocation13 + $0x28] sm:$0xff]
    %v562 = vld [vmem:[#allocation13 + $0x30] sm:$0xff]
    %v563 = vld [vmem:[#allocation13 + $0x38] sm:$0xff]
    %v564 = vld [vmem:[%s11] sm:$0x1]
    %v566 = vlaneseq
    %v567 = vshrl.u32 %v566, 7
    %v568 = vsub.s32 0, %v567
    %v569 = vrot.slane %v564, %v568
    %v572 = vsel %vm357, %v555, 0
    %574 = vmatprep.subr.mxu0 0.0
    %575 = vmatpush1.msra.mxu0 0.0
    %576 = vmatprep.subr.mxu0 0.0
    %577 = vmatpush1.msra.mxu0 0.0
    %578 = vmatprep.subr.mxu0 0.0
    %579 = vmatpush1.msra.mxu0 0.0
    %580 = vmatprep.subr.mxu0 0.0
    %581 = vmatpush1.msra.mxu0 0.0
    %582 = vmatprep.subr.mxu0 0.0
    %583 = vmatpush1.msra.mxu0 0.0
    %584 = vmatprep.subr.mxu0 0.0
    %585 = vmatpush1.msra.mxu0 0.0
    %586 = vmatprep.subr.mxu0 0.0
    %587 = vmatpush1.msra.mxu0 0.0
    %588 = vmatprep.subr.mxu0 0.0
    %589 = vmatpush1.msra.mxu0 0.0
    %590 = vmatprep.subr.mxu0 0.0
    %591 = vmatpush1.msra.mxu0 %v563
    %592 = vmatprep.subr.mxu0 0.0
    %593 = vmatpush1.msra.mxu0 %v562
    %594 = vmatprep.subr.mxu0 0.0
    %595 = vmatpush1.msra.mxu0 %v561
    %596 = vmatprep.subr.mxu0 0.0
    %597 = vmatpush1.msra.mxu0 %v560
    %598 = vmatprep.subr.mxu0 0.0
    %599 = vmatpush1.msra.mxu0 %v559
    %600 = vmatprep.subr.mxu0 0.0
    %601 = vmatpush1.msra.mxu0 %v558
    %602 = vmatprep.subr.mxu0 0.0
    %603 = vmatpush1.msra.mxu0 %v557
    %604 = vmatprep.subr.mxu0 0.0
    %605 = vmatpush1.msra.mxu0 %v556
    %606 = vmatprep.subr.mxu0 0.0
    %607 = vmatpush2.msra.mxu0 0.0
    %608 = vmatprep.subr.mxu0 0.0
    %609 = vmatpush2.msra.mxu0 0.0
    %610 = vmatprep.subr.mxu0 0.0
    %611 = vmatpush2.msra.mxu0 0.0
    %612 = vmatprep.subr.mxu0 0.0
    %613 = vmatpush2.msra.mxu0 0.0
    %614 = vmatprep.subr.mxu0 0.0
    %615 = vmatpush2.msra.mxu0 0.0
    %616 = vmatprep.subr.mxu0 0.0
    %617 = vmatpush2.msra.mxu0 0.0
    %618 = vmatprep.subr.mxu0 0.0
    %619 = vmatpush2.msra.mxu0 0.0
    %620 = vmatprep.subr.mxu0 0.0
    %621 = vmatpush2.msra.mxu0 0.0
    %622 = vmatprep.subr.mxu0 0.0
    %623 = vmatpush2.msra.mxu0 0.0
    %624 = vmatprep.subr.mxu0 0.0
    %625 = vmatpush2.msra.mxu0 0.0
    %626 = vmatprep.subr.mxu0 0.0
    %627 = vmatpush2.msra.mxu0 0.0
    %628 = vmatprep.subr.mxu0 0.0
    %629 = vmatpush2.msra.mxu0 0.0
    %630 = vmatprep.subr.mxu0 0.0
    %631 = vmatpush2.msra.mxu0 0.0
    %632 = vmatprep.subr.mxu0 0.0
    %633 = vmatpush2.msra.mxu0 0.0
    %634 = vmatprep.subr.mxu0 0.0
    %635 = vmatpush2.msra.mxu0 0.0
    %636 = vmatprep.subr.mxu0 0.0
    %637 = vmatpush2.msra.mxu0 0.0
    %638 = vmatprep.mubr.f32.mxu0 0.0
    %639 = vmatmul.mubr.f32.gmra.mxu0 %v572
    %v640 = vpop.f32.mrf.mxu0
    %v641 = vadd.f32 %v569, %v640
    %v642 = vpop.f32.mrf.mxu0
    %643 = vdwg.mxu0
    %v644 = vxor.u32 %v641, 2147483648
    %v645 = vmul.f32 %v644, 1.442695
    %v646 = vpow.pop %v645
    %v647 = vadd.f32 %v646, 1.0
    %v648 = vrcp.pop %v647
    %v649 = vmul.f32 1.0, %v648
    %v650 = vmul.f32 %v641, %v649
    %652 = vrot.lane.b32.xlu0 %v650, 96
    %v653 = vpop.permute.xlu0 %652
    %v655 = vadd.f32 %v650, %v653
    %657 = vrot.lane.b32.xlu0 %v655, 64
    %v658 = vpop.permute.xlu0 %657
    %vm660 = vcmask 785920
    %661 = vst.msk [vmem:[#allocation16] sm:$0xff] %vm660, %v658
    %662 = vrot.lane.b32.xlu0 %v655, 32
    %v663 = vpop.permute.xlu0 %662
    %v665 = vsel %vm340, %v548, %v663
    %v666 = vld [vmem:[#allocation14] sm:$0xff]
    %v667 = vld [vmem:[#allocation14 + $0x8] sm:$0xff]
    %v668 = vld [vmem:[#allocation14 + $0x10] sm:$0xff]
    %v669 = vld [vmem:[#allocation14 + $0x18] sm:$0xff]
    %v670 = vld [vmem:[#allocation14 + $0x20] sm:$0xff]
    %v671 = vld [vmem:[#allocation14 + $0x28] sm:$0xff]
    %v672 = vld [vmem:[#allocation14 + $0x30] sm:$0xff]
    %v673 = vld [vmem:[#allocation14 + $0x38] sm:$0xff]
    %v674 = vld [vmem:[%s13] sm:$0x1]
    %v676 = vlaneseq
    %v677 = vshrl.u32 %v676, 7
    %v678 = vsub.s32 0, %v677
    %v679 = vrot.slane %v674, %v678
    %v682 = vsel %vm357, %v665, 0
    %684 = vmatprep.subr.mxu0 0.0
    %685 = vmatpush1.msra.mxu0 0.0
    %686 = vmatprep.subr.mxu0 0.0
    %687 = vmatpush1.msra.mxu0 0.0
    %688 = vmatprep.subr.mxu0 0.0
    %689 = vmatpush1.msra.mxu0 0.0
    %690 = vmatprep.subr.mxu0 0.0
    %691 = vmatpush1.msra.mxu0 0.0
    %692 = vmatprep.subr.mxu0 0.0
    %693 = vmatpush1.msra.mxu0 0.0
    %694 = vmatprep.subr.mxu0 0.0
    %695 = vmatpush1.msra.mxu0 0.0
    %696 = vmatprep.subr.mxu0 0.0
    %697 = vmatpush1.msra.mxu0 0.0
    %698 = vmatprep.subr.mxu0 0.0
    %699 = vmatpush1.msra.mxu0 0.0
    %700 = vmatprep.subr.mxu0 0.0
    %701 = vmatpush1.msra.mxu0 %v673
    %702 = vmatprep.subr.mxu0 0.0
    %703 = vmatpush1.msra.mxu0 %v672
    %704 = vmatprep.subr.mxu0 0.0
    %705 = vmatpush1.msra.mxu0 %v671
    %706 = vmatprep.subr.mxu0 0.0
    %707 = vmatpush1.msra.mxu0 %v670
    %708 = vmatprep.subr.mxu0 0.0
    %709 = vmatpush1.msra.mxu0 %v669
    %710 = vmatprep.subr.mxu0 0.0
    %711 = vmatpush1.msra.mxu0 %v668
    %712 = vmatprep.subr.mxu0 0.0
    %713 = vmatpush1.msra.mxu0 %v667
    %714 = vmatprep.subr.mxu0 0.0
    %715 = vmatpush1.msra.mxu0 %v666
    %716 = vmatprep.subr.mxu0 0.0
    %717 = vmatpush2.msra.mxu0 0.0
    %718 = vmatprep.subr.mxu0 0.0
    %719 = vmatpush2.msra.mxu0 0.0
    %720 = vmatprep.subr.mxu0 0.0
    %721 = vmatpush2.msra.mxu0 0.0
    %722 = vmatprep.subr.mxu0 0.0
    %723 = vmatpush2.msra.mxu0 0.0
    %724 = vmatprep.subr.mxu0 0.0
    %725 = vmatpush2.msra.mxu0 0.0
    %726 = vmatprep.subr.mxu0 0.0
    %727 = vmatpush2.msra.mxu0 0.0
    %728 = vmatprep.subr.mxu0 0.0
    %729 = vmatpush2.msra.mxu0 0.0
    %730 = vmatprep.subr.mxu0 0.0
    %731 = vmatpush2.msra.mxu0 0.0
    %732 = vmatprep.subr.mxu0 0.0
    %733 = vmatpush2.msra.mxu0 0.0
    %734 = vmatprep.subr.mxu0 0.0
    %735 = vmatpush2.msra.mxu0 0.0
    %736 = vmatprep.subr.mxu0 0.0
    %737 = vmatpush2.msra.mxu0 0.0
    %738 = vmatprep.subr.mxu0 0.0
    %739 = vmatpush2.msra.mxu0 0.0
    %740 = vmatprep.subr.mxu0 0.0
    %741 = vmatpush2.msra.mxu0 0.0
    %742 = vmatprep.subr.mxu0 0.0
    %743 = vmatpush2.msra.mxu0 0.0
    %744 = vmatprep.subr.mxu0 0.0
    %745 = vmatpush2.msra.mxu0 0.0
    %746 = vmatprep.subr.mxu0 0.0
    %747 = vmatpush2.msra.mxu0 0.0
    %748 = vmatprep.mubr.f32.mxu0 0.0
    %749 = vmatmul.mubr.f32.gmra.mxu0 %v682
    %v750 = vpop.f32.mrf.mxu0
    %v751 = vadd.f32 %v679, %v750
    %v752 = vpop.f32.mrf.mxu0
    %753 = vdwg.mxu0
    %v754 = vxor.u32 %v751, 2147483648
    %v755 = vmul.f32 %v754, 1.442695
    %v756 = vpow.pop %v755
    %v757 = vadd.f32 %v756, 1.0
    %v758 = vrcp.pop %v757
    %v759 = vmul.f32 1.0, %v758
    %v760 = vmul.f32 %v751, %v759
    %762 = vrot.lane.b32.xlu0 %v760, 96
    %v763 = vpop.permute.xlu0 %762
    %v765 = vadd.f32 %v760, %v763
    %767 = vrot.lane.b32.xlu0 %v765, 96
    %v768 = vpop.permute.xlu0 %767
    %vm770 = vcmask 1048320
    %771 = vst.msk [vmem:[#allocation16] sm:$0xff] %vm770, %v768
    // Predicated region
    $region90: #{tpu_custom_call.1} parent=1 // pred_check
      _
    $region91: #{tpu_custom_call.1} parent=1 // pred_check_branch
      %773 = sbr.rel (0) target = $region93
    $region92: #{tpu_custom_call.1} parent=1 // pred_region
      %s775 = ssub.s32 128, 128
      %776 = vsyncadd [#allocation4], %s775
      %s778 = sshll.u32 [#allocation16], 4
      %s779 = int_to_ptr.vmem [resolvable:$true] %s778
      %781 = dma.vmem_to_hbm [thread:$0]  %s779, 128, %s14, [#allocation4]
    $region93: #{tpu_custom_call.1} parent=1 // pred_fallthru
      _
    // Predicated region
    $region94: #{tpu_custom_call.1} parent=1 // pred_check
      _
    $region95: #{tpu_custom_call.1} parent=1 // pred_check_branch
      %783 = sbr.rel (0) target = $region97
    $region96: #{tpu_custom_call.1} parent=1 // pred_region
      %784 = dma.done [#allocation4], 128
    $region97: #{tpu_custom_call.1} parent=1 // pred_fallthru
      _
    %785 = vsyncpa [#allocation3], 1
    %786 = vsyncpa [#allocation6], 1
    %787 = vsyncpa [#allocation9], 1
    %788 = vsyncpa [#allocation12], 1
    %789 = vsyncpa [#allocation15], 1
    %790 = vsyncpa [#allocation4], 1

</llo_original>
